<compile_context>
chip_gen: v7x
topology: tpu7x:2x2x1
jax: 0.10.0
libtpu: 0.0.40
codegen_flags: <defaults>
</compile_context>

<pallas_src>
import functools
import jax
import jax.numpy as jnp
from jax.experimental import pallas as pl
from jax.experimental.pallas import tpu as pltpu

VMEM = pltpu.MemorySpace.VMEM


# ----------------------------------------------------------------------------
# Generation-aware VMEM budget (v5e/v6e: 128 MiB physical, v7x: 64 MiB).
# ----------------------------------------------------------------------------
def _vmem_limit_bytes():
    try:
        cap = pltpu.get_tpu_info().vmem_capacity_bytes
        return int(min(cap // 2, 96 * 1024 * 1024))
    except Exception:
        return 32 * 1024 * 1024


_VMEM_LIMIT = _vmem_limit_bytes()
_TILE_BUDGET = int(_VMEM_LIMIT * 0.6)   # headroom for pipeline/compiler temps

# Dense tile targets (128-multiples).
TM, TK = 512, 1024


def _tile(dim, target, step=128):
    """Largest multiple of `step` <= target that divides `dim`; the full dim
    if dim <= target or no such multiple exists."""
    if dim <= target:
        return dim
    t = (target // step) * step
    while t >= step:
        if dim % t == 0:
            return t
        t -= step
    return dim


def _dense_tiles(M, K, N):
    """Pick (tm, tk) for a weight-stationary dense so the resident set fits
    the per-generation VMEM budget."""
    tm, tk = _tile(M, TM), _tile(K, TK)

    def footprint(tm_, tk_):
        return (2 * tm_ * tk_ * 2      # x tile   (bf16, double buffered)
                + 2 * tk_ * N * 2      # w panel  (bf16, double buffered)
                + tm_ * N * 4          # f32 accumulator
                + 2 * tm_ * N * 2      # out tile (bf16, double buffered)
                + 2 * N * 4)           # bias

    for _ in range(64):
        if footprint(tm, tk) <= _TILE_BUDGET:
            break
        if tm >= 256:
            nxt = _tile(M, tm - 128)
            if nxt < tm:
                tm = nxt
                continue
        if tk >= 256:
            nxt = _tile(K, tk - 128)
            if nxt < tk:
                tk = nxt
                continue
        # TODO(synk): fall back to N-tiling for weight panels larger than the
        # VMEM budget (not reached for BERT-class layer shapes).
        break
    return tm, tk


# ----------------------------------------------------------------------------
# Weight-stationary tiled dense: out = act(x @ w + b)
# grid = (M//tm, K//tk); weight block is the full (tk, N) panel, so x is read
# from HBM exactly once and the output stays lane-dense.
# ----------------------------------------------------------------------------
def _dense_kernel(x_ref, w_ref, b_ref, o_ref, acc_ref, *, activation):
    k = pl.program_id(1)

    @pl.when(k == 0)
    def _():
        # Bias loaded straight into the f32 accumulator (no per-K add).
        acc_ref[...] = jnp.broadcast_to(b_ref[...], acc_ref.shape)

    acc_ref[...] += jnp.dot(x_ref[...], w_ref[...],
                            preferred_element_type=jnp.float32)

    @pl.when(k == pl.num_programs(1) - 1)
    def _():
        acc = acc_ref[...]
        if activation == "gelu":
            # TODO(synk): HF BERT uses erf-GELU; tanh approximation used here.
            acc = jax.nn.gelu(acc, approximate=True)
        elif activation == "tanh":
            acc = jnp.tanh(acc)
        o_ref[...] = acc.astype(o_ref.dtype)


def dense(x, w, b, activation=None, out_dtype=jnp.bfloat16):
    """x: (M, K) @ w: (K, N) + b: (N,) -> (M, N), optional activation."""
    M, K = x.shape
    _, N = w.shape
    tm, tk = _dense_tiles(M, K, N)
    return pl.pallas_call(
        functools.partial(_dense_kernel, activation=activation),
        out_shape=jax.ShapeDtypeStruct((M, N), out_dtype),
        grid=(M // tm, K // tk),
        in_specs=[
            pl.BlockSpec((tm, tk), lambda i, k: (i, k)),
            pl.BlockSpec((tk, N), lambda i, k: (k, 0)),
            pl.BlockSpec((1, N), lambda i, k: (0, 0)),
        ],
        out_specs=pl.BlockSpec((tm, N), lambda i, k: (i, 0)),
        scratch_shapes=[pltpu.VMEM((tm, N), jnp.float32)],
        compiler_params=pltpu.CompilerParams(
            dimension_semantics=("parallel", "arbitrary"),
            vmem_limit_bytes=_VMEM_LIMIT),
    )(x, w, b.reshape(1, N))


# ----------------------------------------------------------------------------
# Weight-stationary dense with fused residual-add + LayerNorm epilogue
# ----------------------------------------------------------------------------
def _dense_add_ln_kernel(x_ref, w_ref, b_ref, r_ref, g_ref, bt_ref,
                         o_ref, acc_ref, *, eps):
    k = pl.program_id(1)

    @pl.when(k == 0)
    def _():
        acc_ref[...] = jnp.broadcast_to(b_ref[...], acc_ref.shape)

    acc_ref[...] += jnp.dot(x_ref[...], w_ref[...],
                            preferred_element_type=jnp.float32)

    @pl.when(k == pl.num_programs(1) - 1)
    def _():
        y = acc_ref[...] + r_ref[...].astype(jnp.float32)
        mu = jnp.mean(y, axis=-1, keepdims=True)
        yc = y - mu
        var = jnp.mean(yc * yc, axis=-1, keepdims=True)
        o_ref[...] = (yc * jax.lax.rsqrt(var + eps) * g_ref[...]
                      + bt_ref[...]).astype(o_ref.dtype)


def dense_add_layer_norm(x, w, b, residual, gamma, beta, eps=1e-12,
                         out_dtype=jnp.bfloat16):
    """LayerNorm(residual + (x @ w + b)); LN fused into the matmul epilogue."""
    M, K = x.shape
    _, H = w.shape
    tm, tk = _dense_tiles(M, K, H)
    return pl.pallas_call(
        functools.partial(_dense_add_ln_kernel, eps=eps),
        out_shape=jax.ShapeDtypeStruct((M, H), out_dtype),
        grid=(M // tm, K // tk),
        in_specs=[
            pl.BlockSpec((tm, tk), lambda i, k: (i, k)),
            pl.BlockSpec((tk, H), lambda i, k: (k, 0)),
            pl.BlockSpec((1, H), lambda i, k: (0, 0)),
            pl.BlockSpec((tm, H), lambda i, k: (i, 0)),
            pl.BlockSpec((1, H), lambda i, k: (0, 0)),
            pl.BlockSpec((1, H), lambda i, k: (0, 0)),
        ],
        out_specs=pl.BlockSpec((tm, H), lambda i, k: (i, 0)),
        scratch_shapes=[pltpu.VMEM((tm, H), jnp.float32)],
        compiler_params=pltpu.CompilerParams(
            dimension_semantics=("parallel", "arbitrary"),
            vmem_limit_bytes=_VMEM_LIMIT),
    )(x, w, b.reshape(1, H), residual, gamma.reshape(1, H), beta.reshape(1, H))


# ----------------------------------------------------------------------------
# Plain LayerNorm (embedding LN - no zero-residual DMA)
# ----------------------------------------------------------------------------
def _ln_kernel(x_ref, g_ref, b_ref, o_ref, *, eps):
    x = x_ref[...].astype(jnp.float32)
    mu = jnp.mean(x, axis=-1, keepdims=True)
    xc = x - mu
    var = jnp.mean(xc * xc, axis=-1, keepdims=True)
    o_ref[...] = (xc * jax.lax.rsqrt(var + eps) * g_ref[...]
                  + b_ref[...]).astype(o_ref.dtype)


def layer_norm(x, gamma, beta, eps=1e-12, out_dtype=jnp.bfloat16):
    M, H = x.shape
    tm = _tile(M, TM)
    return pl.pallas_call(
        functools.partial(_ln_kernel, eps=eps),
        out_shape=jax.ShapeDtypeStruct((M, H), out_dtype),
        grid=(M // tm,),
        in_specs=[pl.BlockSpec((tm, H), lambda i: (i, 0)),
                  pl.BlockSpec((1, H), lambda i: (0, 0)),
                  pl.BlockSpec((1, H), lambda i: (0, 0))],
        out_specs=pl.BlockSpec((tm, H), lambda i: (i, 0)),
        compiler_params=pltpu.CompilerParams(
            dimension_semantics=("parallel",),
            vmem_limit_bytes=_VMEM_LIMIT),
    )(x, gamma.reshape(1, H), beta.reshape(1, H))


# ----------------------------------------------------------------------------
# Attention: Q/K/V delivered as three aligned (S, H) column-block views of the
# packed (B, S, 3H) slab; grid = (batch, q_tiles) so both v7x TensorCores stay
# busy at small batch and the (tq, S) score matrix is bounded.  Per-head
# results are stored directly into the lane-dense (tq, H) output block
# (no concatenate -> bounded vreg live ranges, no XLU relayout of the concat).
# ----------------------------------------------------------------------------
def _attention_kernel(q_ref, k_ref, v_ref, o_ref, *, n_heads, dh, scale):
    q = q_ref[0]                                       # (tq, H) bf16
    k = k_ref[0]                                       # (S,  H) bf16
    v = v_ref[0]                                       # (S,  H) bf16
    for h in range(n_heads):                           # static loop over heads
        lo, hi = h * dh, (h + 1) * dh
        # Contract last dims directly - no explicit transpose of K.
        s = jax.lax.dot_general(q[:, lo:hi], k[:, lo:hi],
                                (((1,), (1,)), ((), ())),
                                preferred_element_type=jnp.float32) * scale
        m = jnp.max(s, axis=-1, keepdims=True)
        e = jnp.exp(s - m)
        p = e * pl.reciprocal(jnp.sum(e, axis=-1, keepdims=True), approx=True)
        ctx = jnp.dot(p.astype(v.dtype), v[:, lo:hi],
                      preferred_element_type=jnp.float32)
        # Store this head's columns; intermediates die here (no concat).
        o_ref[0, :, lo:hi] = ctx.astype(o_ref.dtype)
    # TODO(synk): for dh=64 heads the odd-head slices start at a 64-lane
    # offset; reordering the fused wqkv columns (or processing head pairs)
    # would remove the per-head lane relayout.


def attention(qkv, batch, seq, n_heads):
    """qkv: (B*S, 3H) packed [Q | K | V] -> context (B*S, H)."""
    _, threeH = qkv.shape
    H = threeH // 3
    dh = H // n_heads
    qkv = qkv.reshape(batch, seq, threeH)
    tq = _tile(seq, 256)
    out = pl.pallas_call(
        functools.partial(_attention_kernel, n_heads=n_heads, dh=dh,
                          scale=1.0 / (dh ** 0.5)),
        out_shape=jax.ShapeDtypeStruct((batch, seq, H), jnp.bfloat16),
        grid=(batch, seq // tq),
        in_specs=[
            pl.BlockSpec((1, tq, H), lambda b, qi: (b, qi, 0)),   # Q rows
            pl.BlockSpec((1, seq, H), lambda b, qi: (b, 0, 1)),   # all K
            pl.BlockSpec((1, seq, H), lambda b, qi: (b, 0, 2)),   # all V
        ],
        out_specs=pl.BlockSpec((1, tq, H), lambda b, qi: (b, qi, 0)),
        compiler_params=pltpu.CompilerParams(
            dimension_semantics=("parallel", "parallel"),
            vmem_limit_bytes=_VMEM_LIMIT),
    )(qkv, qkv, qkv)
    return out.reshape(batch * seq, H)


# ----------------------------------------------------------------------------
# Pooler + NSP head (tiny, single fused kernel)
# ----------------------------------------------------------------------------
def _nsp_head_kernel(cls_ref, pw_ref, pb_ref, nw_ref, nb_ref, o_ref):
    pooled = jnp.tanh(
        jnp.dot(cls_ref[...], pw_ref[...], preferred_element_type=jnp.float32)
        + pb_ref[...])
    o_ref[...] = (jnp.dot(pooled.astype(nw_ref.dtype), nw_ref[...],
                          preferred_element_type=jnp.float32) + nb_ref[...])


def nsp_head(cls, pool_w, pool_b, nsp_w, nsp_b):
    B, H = cls.shape
    return pl.pallas_call(
        _nsp_head_kernel,
        out_shape=jax.ShapeDtypeStruct((B, 2), jnp.float32),
        in_specs=[pl.BlockSpec(memory_space=VMEM)] * 5,
        out_specs=pl.BlockSpec(memory_space=VMEM),
    )(cls, pool_w, pool_b.reshape(1, H), nsp_w, nsp_b.reshape(1, 2))


# ----------------------------------------------------------------------------
# Loss / score heads
# ----------------------------------------------------------------------------
def _triplet_loss_kernel(pos_ref, neg_ref, o_ref, *, margin):
    def score(logits):                       # 1 - softmax(logits)[:, 0]
        m = jnp.max(logits, axis=-1, keepdims=True)
        e = jnp.exp(logits - m)
        p0 = e[:, 0:1] / jnp.sum(e, axis=-1, keepdims=True)
        return 1.0 - p0                      # (B, 1)

    losses = jnp.maximum(score(pos_ref[...]) - score(neg_ref[...]) + margin, 0.0)
    o_ref[...] = jnp.mean(losses, keepdims=True)     # (1, 1)


def triplet_loss(pos_logits, neg_logits, margin=0.2):
    out = pl.pallas_call(
        functools.partial(_triplet_loss_kernel, margin=margin),
        out_shape=jax.ShapeDtypeStruct((1, 1), jnp.float32),
        in_specs=[pl.BlockSpec(memory_space=VMEM)] * 2,
        out_specs=pl.BlockSpec(memory_space=VMEM),
    )(pos_logits, neg_logits)
    return out[0, 0]


def _nsp_score_kernel(l_ref, o_ref):
    l = l_ref[...]
    m = jnp.max(l, axis=-1, keepdims=True)
    e = jnp.exp(l - m)
    o_ref[...] = e[:, 0:1] / jnp.sum(e, axis=-1, keepdims=True)


def nsp_scores(logits):
    B = logits.shape[0]
    out = pl.pallas_call(
        _nsp_score_kernel,
        out_shape=jax.ShapeDtypeStruct((B, 1), jnp.float32),
        in_specs=[pl.BlockSpec(memory_space=VMEM)],
        out_specs=pl.BlockSpec(memory_space=VMEM),
    )(logits)
    return out[:, 0]


# ----------------------------------------------------------------------------
# Small synthetic BertForNextSentencePrediction (deterministic init)
# ----------------------------------------------------------------------------
def init_bert_params(key, *, vocab, hidden, n_layers, n_heads, inter, max_pos):
    std = 0.02
    keys = iter(jax.random.split(key, 8 * n_layers + 16))

    def nrm(shape, dtype=jnp.bfloat16):
        return (std * jax.random.normal(next(keys), shape,
                                        dtype=jnp.float32)).astype(dtype)

    params = {
        "n_heads": n_heads,
        # Embedding tables kept in bf16: half the HBM bytes for the gather.
        "word_emb": nrm((vocab, hidden)),
        "pos_emb": nrm((max_pos, hidden)),
        "type_emb": nrm((2, hidden)),
        "emb_ln_g": jnp.ones((hidden,), jnp.float32),
        "emb_ln_b": jnp.zeros((hidden,), jnp.float32),
        "pool_w": nrm((hidden, hidden)),
        "pool_b": jnp.zeros((hidden,), jnp.float32),
        "nsp_w": nrm((hidden, 2)),
        "nsp_b": jnp.zeros((2,), jnp.float32),
        "layers": [],
    }
    for _ in range(n_layers):
        params["layers"].append({
            # Q/K/V projections pre-fused into one matmul (x read once).
            "wqkv": nrm((hidden, 3 * hidden)),
            "bqkv": jnp.zeros((3 * hidden,), jnp.float32),
            "wo": nrm((hidden, hidden)),
            "bo": jnp.zeros((hidden,), jnp.float32),
            "ln1_g": jnp.ones((hidden,), jnp.float32),
            "ln1_b": jnp.zeros((hidden,), jnp.float32),
            "wi": nrm((hidden, inter)),
            "bi": jnp.zeros((inter,), jnp.float32),
            "wo2": nrm((inter, hidden)),
            "bo2": jnp.zeros((hidden,), jnp.float32),
            "ln2_g": jnp.ones((hidden,), jnp.float32),
            "ln2_b": jnp.zeros((hidden,), jnp.float32),
        })
    return params


def bert_nsp_logits(params, ids):
    """BertForNextSentencePrediction(input_ids).logits -> (B, 2)."""
    B, S = ids.shape
    H = params["word_emb"].shape[1]
    nH = params["n_heads"]

    # Embedding gather + sum (XLA glue, bf16); LayerNorm is a Pallas kernel.
    # TODO(synk): segment (token-type) ids fixed to 0, as in the reference call.
    x = (params["word_emb"][ids]
         + params["pos_emb"][:S][None, :, :]
         + params["type_emb"][0][None, None, :]).reshape(B * S, H)
    x = layer_norm(x, params["emb_ln_g"], params["emb_ln_b"])          # bf16

    for layer in params["layers"]:
        qkv = dense(x, layer["wqkv"], layer["bqkv"])                   # (M, 3H)
        ctx = attention(qkv, B, S, nH)                                 # (M, H)
        x = dense_add_layer_norm(ctx, layer["wo"], layer["bo"],
                                 x, layer["ln1_g"], layer["ln1_b"])
        h = dense(x, layer["wi"], layer["bi"], activation="gelu")      # (M, I)
        x = dense_add_layer_norm(h, layer["wo2"], layer["bo2"],
                                 x, layer["ln2_g"], layer["ln2_b"])

    cls = x.reshape(B, S, H)[:, 0, :]                                  # [CLS]
    return nsp_head(cls, params["pool_w"], params["pool_b"],
                    params["nsp_w"], params["nsp_b"])                  # (B, 2)


def acrobert_forward(params, pos_ids, neg_ids=None, margin=0.2, train=True):
    """Mirrors AcronymBERT.forward.
    train=True  -> scalar triplet loss
    train=False -> softmax(logits)[:, 0] per sample
    (masked_pos_x is unused by the reference forward)."""
    if not train:
        return nsp_scores(bert_nsp_logits(params, pos_ids))
    # Run the positive and negative passes as ONE batched forward: the weight
    # panels are read from HBM once and every matmul gets 2x the M dimension.
    B = pos_ids.shape[0]
    logits = bert_nsp_logits(params, jnp.concatenate([pos_ids, neg_ids], 0))
    return triplet_loss(logits[:B], logits[B:], margin=margin)


# TODO(synk): BertTokenizer / pretrained-weight loading have no Pallas
# equivalent; token ids are inputs and weights are synthetic.

if __name__ == "__main__":
    B, S = 2, 8
    VOCAB, HIDDEN, LAYERS, HEADS, INTER, MAX_POS = 64, 32, 2, 2, 64, 16

    root = jax.random.PRNGKey(0)
    k_param, k_pos, k_neg = jax.random.split(root, 3)

    params = init_bert_params(k_param, vocab=VOCAB, hidden=HIDDEN,
                              n_layers=LAYERS, n_heads=HEADS,
                              inter=INTER, max_pos=MAX_POS)

    pos_ids = jax.random.randint(k_pos, (B, S), 0, VOCAB, dtype=jnp.int32)
    neg_ids = jax.random.randint(k_neg, (B, S), 0, VOCAB, dtype=jnp.int32)

    loss = acrobert_forward(params, pos_ids, neg_ids, margin=0.2, train=True)
    scores = acrobert_forward(params, pos_ids, train=False)

    jax.block_until_ready(loss)
    jax.block_until_ready(scores)

    assert loss.shape == () and scores.shape == (B,)
    print("KERNEL_OK")
</pallas_src>

<mosaic_0001>
module attributes {stable_mosaic.version = 11 : i64} {
  func.func @_ln_kernel(%arg0: i32, %arg1: memref<32x32xbf16, #tpu.memory_space<vmem>>, %arg2: memref<1x32xf32, #tpu.memory_space<vmem>>, %arg3: memref<1x32xf32, #tpu.memory_space<vmem>>, %arg4: memref<32x32xbf16, #tpu.memory_space<vmem>>) attributes {dimension_semantics = [#tpu.dimension_semantics<parallel>], iteration_bounds = array<i64: 1>, scalar_prefetch = 0 : i64, scratch_operands = 0 : i64, tpu.core_type = #tpu.core_type<tc>, window_params = [{transform_indices = @transform_0, window_bounds = array<i64: 32, 32>}, {pipeline_mode = #tpu.pipeline_mode<synchronous>, transform_indices = @transform_1, window_bounds = array<i64: 1, 32>}, {pipeline_mode = #tpu.pipeline_mode<synchronous>, transform_indices = @transform_2, window_bounds = array<i64: 1, 32>}, {transform_indices = @transform_3, window_bounds = array<i64: 32, 32>}]} {
    %c0 = arith.constant 0 : index
    %c0_0 = arith.constant 0 : index
    %0 = vector.load %arg1[%c0, %c0_0] : memref<32x32xbf16, #tpu.memory_space<vmem>>, vector<32x32xbf16>
    %1 = arith.extf %0 : vector<32x32xbf16> to vector<32x32xf32>
    %cst = arith.constant dense<0.000000e+00> : vector<32xf32>
    %2 = vector.multi_reduction <add>, %1, %cst [1] : vector<32x32xf32> to vector<32xf32>
    %3 = vector.shape_cast %2 : vector<32xf32> to vector<32x1xf32>
    %cst_1 = arith.constant 3.200000e+01 : f32
    %4 = vector.broadcast %cst_1 : f32 to vector<32x1xf32>
    %5 = arith.divf %3, %4 : vector<32x1xf32>
    %6 = vector.broadcast %5 : vector<32x1xf32> to vector<32x32xf32>
    %7 = arith.subf %1, %6 : vector<32x32xf32>
    %8 = arith.mulf %7, %7 : vector<32x32xf32>
    %cst_2 = arith.constant dense<0.000000e+00> : vector<32xf32>
    %9 = vector.multi_reduction <add>, %8, %cst_2 [1] : vector<32x32xf32> to vector<32xf32>
    %10 = vector.shape_cast %9 : vector<32xf32> to vector<32x1xf32>
    %cst_3 = arith.constant 3.200000e+01 : f32
    %11 = vector.broadcast %cst_3 : f32 to vector<32x1xf32>
    %12 = arith.divf %10, %11 : vector<32x1xf32>
    %cst_4 = arith.constant 9.99999996E-13 : f32
    %13 = vector.broadcast %cst_4 : f32 to vector<32x1xf32>
    %14 = arith.addf %12, %13 : vector<32x1xf32>
    %15 = math.rsqrt %14 : vector<32x1xf32>
    %16 = vector.broadcast %15 : vector<32x1xf32> to vector<32x32xf32>
    %17 = arith.mulf %7, %16 : vector<32x32xf32>
    %c0_5 = arith.constant 0 : index
    %c0_6 = arith.constant 0 : index
    %18 = vector.load %arg2[%c0_5, %c0_6] : memref<1x32xf32, #tpu.memory_space<vmem>>, vector<1x32xf32>
    %19 = vector.broadcast %18 : vector<1x32xf32> to vector<32x32xf32>
    %20 = arith.mulf %17, %19 : vector<32x32xf32>
    %c0_7 = arith.constant 0 : index
    %c0_8 = arith.constant 0 : index
    %21 = vector.load %arg3[%c0_7, %c0_8] : memref<1x32xf32, #tpu.memory_space<vmem>>, vector<1x32xf32>
    %22 = vector.broadcast %21 : vector<1x32xf32> to vector<32x32xf32>
    %23 = arith.addf %20, %22 : vector<32x32xf32>
    %24 = arith.truncf %23 : vector<32x32xf32> to vector<32x32xbf16>
    %c0_9 = arith.constant 0 : index
    %c0_10 = arith.constant 0 : index
    %25 = vector.load %arg4[%c0_9, %c0_10] : memref<32x32xbf16, #tpu.memory_space<vmem>>, vector<32x32xbf16>
    tpu.vector_store %arg4[%c0_9, %c0_10], %24 {strides = array<i32>} : memref<32x32xbf16, #tpu.memory_space<vmem>>, vector<32x32xbf16>,
    return
  }
  func.func @transform_0(%arg0: i32) -> (i32, i32) {
    %c0_i32 = arith.constant 0 : i32
    %c0_i32_0 = arith.constant 0 : i32
    return %arg0, %c0_i32 : i32, i32
  }
  func.func @transform_1(%arg0: i32) -> (i32, i32) {
    %c0_i32 = arith.constant 0 : i32
    %c0_i32_0 = arith.constant 0 : i32
    %c0_i32_1 = arith.constant 0 : i32
    return %c0_i32, %c0_i32_0 : i32, i32
  }
  func.func @transform_2(%arg0: i32) -> (i32, i32) {
    %c0_i32 = arith.constant 0 : i32
    %c0_i32_0 = arith.constant 0 : i32
    %c0_i32_1 = arith.constant 0 : i32
    return %c0_i32, %c0_i32_0 : i32, i32
  }
  func.func @transform_3(%arg0: i32) -> (i32, i32) {
    %c0_i32 = arith.constant 0 : i32
    %c0_i32_0 = arith.constant 0 : i32
    return %arg0, %c0_i32 : i32, i32
  }
}

</mosaic_0001>

<llo_original>
// kernel: tpu_custom_call.1
$region0: #{tpu_custom_call.1}
  #allocation0 [shape = 'u32[]', space=smem, size = 0x4, offset = 0x4, fixed_abs, tag = 'smem constant byte address 0x4 - core index']
  #allocation1 [shape = 'u32[144,128]{1,0:T(1,128)}', space=vmem, size = 0x12000, scoped, tag = 'internal scratch']
  %s0 = inlined_call_operand.hbm [shape: bf16[32,32], index: 0, kind: input, shape index: {}]
  %s1 = inlined_call_operand.vmem [shape: f32[1,32], index: 1, kind: input, shape index: {}]
  %s2 = inlined_call_operand.vmem [shape: f32[1,32], index: 2, kind: input, shape index: {}]
  %s3 = inlined_call_operand.hbm [shape: bf16[32,32], index: 3, kind: output, shape index: {}]
  %s4 = sld [smem:[#allocation0]]
  $region26: #{tpu_custom_call.1} parent=0
    _
  %s6 = ssub.s32 1, %s4
  %s7 = scalar_select 0, %s6, %s4
  $region1: #{tpu_custom_call.1} parent=0
    #allocation2 [shape = 'u8[8192]{0}', space=vmem, size = 0x2000, scoped, tag = 'input window, operand 0, single buffered']
    #allocation3 [shape = 's32[1]{0}', space=sflag, size = 0x4, scoped, tag = 'scoped memory for tpu_custom_call.1']
    #allocation4 [shape = 's32[1]{0}', space=sflag, size = 0x4, scoped, tag = 'scoped memory for tpu_custom_call.1']
    #allocation5 [shape = 'u8[8192]{0}', space=vmem, size = 0x2000, scoped, tag = 'output window, operand 0, single buffered']
    %8 = vsyncpa [#allocation3], 0
    %9 = vsyncpa [#allocation4], 0
    // Predicated region
    $region2: #{tpu_custom_call.1} parent=1 // pred_check
      _
    $region3: #{tpu_custom_call.1} parent=1 // pred_check_branch
      %11 = sbr.rel (0) target = $region5
    $region4: #{tpu_custom_call.1} parent=1 // pred_region
      %s13 = ssub.s32 256, 256
      %14 = vsyncadd [#allocation3], %s13
      %s15 = sshll.u32 [#allocation2], 4
      %s16 = int_to_ptr.vmem [resolvable:$true] %s15
      %21 = dma.hbm_to_vmem [thread:$0]  %s0, 256, %s16, [#allocation3], 64, 64, 4
    $region5: #{tpu_custom_call.1} parent=1 // pred_fallthru
      _
    // Predicated region
    $region6: #{tpu_custom_call.1} parent=1 // pred_check
      _
    $region7: #{tpu_custom_call.1} parent=1 // pred_check_branch
      %23 = sbr.rel (0) target = $region9
    $region8: #{tpu_custom_call.1} parent=1 // pred_region
      _
    $region9: #{tpu_custom_call.1} parent=1 // pred_fallthru
      _
    // Predicated region
    $region10: #{tpu_custom_call.1} parent=1 // pred_check
      _
    $region11: #{tpu_custom_call.1} parent=1 // pred_check_branch
      %25 = sbr.rel (0) target = $region13
    $region12: #{tpu_custom_call.1} parent=1 // pred_region
      _
    $region13: #{tpu_custom_call.1} parent=1 // pred_fallthru
      _
    // Predicated region
    $region14: #{tpu_custom_call.1} parent=1 // pred_check
      _
    $region15: #{tpu_custom_call.1} parent=1 // pred_check_branch
      %27 = sbr.rel (0) target = $region17
    $region16: #{tpu_custom_call.1} parent=1 // pred_region
      %28 = dma.done [#allocation3], 256
    $region17: #{tpu_custom_call.1} parent=1 // pred_fallthru
      _
    %v29 = vld [vmem:[#allocation2] sm:$0xf]
    %v30 = vld [vmem:[#allocation2 + $0x4] sm:$0xf]
    %v31 = vld [vmem:[#allocation2 + $0x8] sm:$0xf]
    %v32 = vld [vmem:[#allocation2 + $0xc] sm:$0xf]
    %v33 = vunpack.c.l.bf16 %v29
    %v34 = vunpack.c.l.bf16 %v30
    %v35 = vunpack.c.l.bf16 %v31
    %v36 = vunpack.c.l.bf16 %v32
    %vm37 = vcmask 261120
    %v38 = vsel %vm37, %v33, 0.0
    %39 = vadd.xlane.f32.xlu0 %v38
    %v40 = vpop.xlane.xlu0 %39
    %v41 = vsel %vm37, %v34, 0.0
    %42 = vadd.xlane.f32.xlu0 %v41
    %v43 = vpop.xlane.xlu0 %42
    %v44 = vsel %vm37, %v35, 0.0
    %45 = vadd.xlane.f32.xlu0 %v44
    %v46 = vpop.xlane.xlu0 %45
    %v47 = vsel %vm37, %v36, 0.0
    %48 = vadd.xlane.f32.xlu0 %v47
    %v49 = vpop.xlane.xlu0 %48
    %v50 = vrcp.pop 32.0
    %v51 = vmul.f32 %v40, %v50
    %v52 = vmul.f32 %v43, %v50
    %v53 = vmul.f32 %v46, %v50
    %v54 = vmul.f32 %v49, %v50
    %v55 = vsub.f32 %v33, %v51
    %v56 = vsub.f32 %v34, %v52
    %v57 = vsub.f32 %v35, %v53
    %v58 = vsub.f32 %v36, %v54
    %v59 = vmul.f32 %v55, %v55
    %v60 = vmul.f32 %v56, %v56
    %v61 = vmul.f32 %v57, %v57
    %v62 = vmul.f32 %v58, %v58
    %v63 = vsel %vm37, %v59, 0.0
    %64 = vadd.xlane.f32.xlu0 %v63
    %v65 = vpop.xlane.xlu0 %64
    %v66 = vsel %vm37, %v60, 0.0
    %67 = vadd.xlane.f32.xlu0 %v66
    %v68 = vpop.xlane.xlu0 %67
    %v69 = vsel %vm37, %v61, 0.0
    %70 = vadd.xlane.f32.xlu0 %v69
    %v71 = vpop.xlane.xlu0 %70
    %v72 = vsel %vm37, %v62, 0.0
    %73 = vadd.xlane.f32.xlu0 %v72
    %v74 = vpop.xlane.xlu0 %73
    %v75 = vmul.f32 %v65, %v50
    %v76 = vmul.f32 %v68, %v50
    %v77 = vmul.f32 %v71, %v50
    %v78 = vmul.f32 %v74, %v50
    %v79 = vadd.f32 %v75, 1e-12
    %v80 = vadd.f32 %v76, 1e-12
    %v81 = vadd.f32 %v77, 1e-12
    %v82 = vadd.f32 %v78, 1e-12
    %v83 = vrsqrt.pop %v79
    %v84 = vrsqrt.pop %v80
    %v85 = vrsqrt.pop %v81
    %v86 = vrsqrt.pop %v82
    %v87 = vmul.f32 %v55, %v83
    %v88 = vmul.f32 %v56, %v84
    %v89 = vmul.f32 %v57, %v85
    %v90 = vmul.f32 %v58, %v86
    %v91 = vld [vmem:[%s1] sm:$0x1]
    %v93 = vlaneseq
    %v94 = vshrl.u32 %v93, 7
    %v95 = vsub.s32 0, %v94
    %v96 = vrot.slane %v91, %v95
    %v98 = vmul.f32 %v87, %v96
    %v99 = vmul.f32 %v88, %v96
    %v100 = vmul.f32 %v89, %v96
    %v101 = vmul.f32 %v90, %v96
    %v102 = vld [vmem:[%s2] sm:$0x1]
    %v104 = vlaneseq
    %v105 = vshrl.u32 %v104, 7
    %v106 = vsub.s32 0, %v105
    %v107 = vrot.slane %v102, %v106
    %v109 = vadd.f32 %v98, %v107
    %v110 = vadd.f32 %v99, %v107
    %v111 = vadd.f32 %v100, %v107
    %v112 = vadd.f32 %v101, %v107
    %v113 = vpack.c.bf16 %v110, %v109
    %v114 = vpack.c.bf16 %v112, %v111
    %v117 = vunpack.c.l.b16 %v113
    %v118 = vunpack.c.h.b16 %v113
    %v119 = vunpack.c.l.b16 %v114
    %v120 = vunpack.c.h.b16 %v114
    %v121 = vpack.c.b16 %v117, %v117
    %v122 = vpack.c.b16 %v118, %v118
    %v123 = vpack.c.b16 %v119, %v119
    %v124 = vpack.c.b16 %v120, %v120
    %vm129 = vcmask 257024
    %130 = vst.msk [vmem:[#allocation5] sm:$0xf] %vm129, %v121
    %131 = vst.msk [vmem:[#allocation5 + $0x4] sm:$0xf] %vm129, %v122
    %132 = vst.msk [vmem:[#allocation5 + $0x8] sm:$0xf] %vm129, %v123
    %133 = vst.msk [vmem:[#allocation5 + $0xc] sm:$0xf] %vm129, %v124
    // Predicated region
    $region18: #{tpu_custom_call.1} parent=1 // pred_check
      _
    $region19: #{tpu_custom_call.1} parent=1 // pred_check_branch
      %135 = sbr.rel (0) target = $region21
    $region20: #{tpu_custom_call.1} parent=1 // pred_region
      %s137 = ssub.s32 256, 256
      %138 = vsyncadd [#allocation4], %s137
      %s139 = sshll.u32 [#allocation5], 4
      %s140 = int_to_ptr.vmem [resolvable:$true] %s139
      %145 = dma.vmem_to_hbm [thread:$0]  %s140, 256, %s3, [#allocation4], 64, 64, 4
    $region21: #{tpu_custom_call.1} parent=1 // pred_fallthru
      _
    // Predicated region
    $region22: #{tpu_custom_call.1} parent=1 // pred_check
      _
    $region23: #{tpu_custom_call.1} parent=1 // pred_check_branch
      %147 = sbr.rel (0) target = $region25
    $region24: #{tpu_custom_call.1} parent=1 // pred_region
      %148 = dma.done [#allocation4], 256
    $region25: #{tpu_custom_call.1} parent=1 // pred_fallthru
      _
    %149 = vsyncpa [#allocation3], 1
    %150 = vsyncpa [#allocation4], 1

</llo_original>
